<compile_context>
chip_gen: v6e
topology: v6e:2x2x1
jax: 0.10.0
libtpu: 0.0.40
codegen_flags: <defaults>
</compile_context>

<pallas_src>
import functools

import jax
import jax.numpy as jnp
from jax import lax
from jax.experimental import pallas as pl
from jax.experimental.pallas import tpu as pltpu


# ----------------------------- small helpers -----------------------------
def _round_up(v, m):
    return (v + m - 1) // m * m


def _divisor_tile(dim, target, step):
    """Largest t <= target with dim % t == 0 and t % step == 0, else dim."""
    if dim <= target:
        return dim
    t = (target // step) * step
    while t >= step:
        if dim % t == 0:
            return t
        t -= step
    return dim


def _smallest_divisor_tile(dim, minimum, step):
    """Smallest multiple-of-step divisor of dim that is >= minimum, else dim."""
    t = _round_up(max(minimum, step), step)
    while t < dim and dim % t != 0:
        t += step
    return t if (t <= dim and dim % t == 0) else dim


def _vmem_capacity_bytes():
    try:
        info = pltpu.get_tpu_info()
        cap = getattr(info, "vmem_capacity_bytes", None)
        if cap:
            return int(cap)
    except Exception:
        pass
    return 64 << 20  # conservative (v7x per-TC)


# ------------------------------- the kernel -------------------------------
def _shift_tokens_kernel(*refs, shifts, f, tm, halo_rows, seq_len,
                         need_prev, need_next, has_mask, xs_in_scratch):
    it = iter(refs)
    x_c_ref = next(it)
    x_p_ref = next(it) if need_prev else None
    x_n_ref = next(it) if need_next else None
    m_c_ref = next(it) if has_mask else None
    m_p_ref = next(it) if (has_mask and need_prev) else None
    m_n_ref = next(it) if (has_mask and need_next) else None
    w_ref = next(it)
    b_ref = next(it)
    o_ref = next(it)
    xs_ref = next(it) if xs_in_scratch else None

    j = pl.program_id(1)           # sequence-tile index
    d_full = x_c_ref.shape[-1]

    def build_shifted():
        x_c = x_c_ref[0]                                   # (tm, D)
        xs = x_c                                           # zero-shift + rest

        groups = {}                                        # shift -> segment ids
        for i, s in enumerate(shifts):
            if s != 0:
                groups.setdefault(s, []).append(i)
        if not groups:
            return xs

        # mask-before-shift (only affects nonzero-shift segments; jnp.where is
        # NaN-safe).  Applied to the full width once; un-shifted columns keep
        # the raw x_c value via the final column select.
        x_mc = x_c
        if has_mask:
            x_mc = jnp.where(m_c_ref[0] != 0, x_c, jnp.zeros_like(x_c))
        x_ph = x_nh = None
        if need_prev:
            x_ph = x_p_ref[0]                              # (halo_rows, D)
            if has_mask:
                x_ph = jnp.where(m_p_ref[0] != 0, x_ph, jnp.zeros_like(x_ph))
        if need_next:
            x_nh = x_n_ref[0]                              # (halo_rows, D)
            if has_mask:
                x_nh = jnp.where(m_n_ref[0] != 0, x_nh, jnp.zeros_like(x_nh))

        sub = lax.broadcasted_iota(jnp.int32, (tm, 1), 0)  # local seq row
        row_g = sub + j * tm                               # global seq row
        col = lax.broadcasted_iota(jnp.int32, (1, d_full), 1)  # lane index

        # One full-width (tm, D) roll + select per *distinct* nonzero shift;
        # assemble entirely in vregs -> a single lane-dense store later.
        for s, seg_ids in groups.items():
            if s > 0:
                rolled = pltpu.roll(x_mc, shift=s % tm, axis=0)
                if x_ph is not None:
                    if halo_rows < tm:
                        rh = pltpu.roll(x_ph, shift=s % halo_rows, axis=0)
                        sub_h = lax.broadcasted_iota(
                            jnp.int32, (halo_rows, 1), 0)
                        top = jnp.where(sub_h < s, rh, rolled[:halo_rows])
                        comb = jnp.concatenate([top, rolled[halo_rows:]],
                                               axis=0)
                    else:                                   # halo == full tile
                        rh = pltpu.roll(x_ph, shift=s % tm, axis=0)
                        comb = jnp.where(sub < s, rh, rolled)
                else:
                    comb = rolled
                shifted = jnp.where(row_g >= s, comb, jnp.zeros_like(comb))
            else:
                a = -s
                rolled = pltpu.roll(x_mc, shift=(-a) % tm, axis=0)
                if x_nh is not None:
                    if halo_rows < tm:
                        rh = pltpu.roll(x_nh, shift=(-a) % halo_rows, axis=0)
                        sub_h = lax.broadcasted_iota(
                            jnp.int32, (halo_rows, 1), 0)
                        bot = jnp.where(sub_h >= halo_rows - a, rh,
                                        rolled[tm - halo_rows:])
                        comb = jnp.concatenate([rolled[:tm - halo_rows], bot],
                                               axis=0)
                    else:
                        rh = pltpu.roll(x_nh, shift=(-a) % tm, axis=0)
                        comb = jnp.where(sub >= tm - a, rh, rolled)
                else:
                    comb = rolled
                shifted = jnp.where(row_g < seq_len - a, comb,
                                    jnp.zeros_like(comb))

            in_cols = None
            for i in seg_ids:
                m = jnp.logical_and(col >= i * f, col < (i + 1) * f)
                in_cols = m if in_cols is None else jnp.logical_or(in_cols, m)
            xs = jnp.where(in_cols, shifted, xs)
        return xs

    if xs_in_scratch:
        # Build once per (batch, seq-tile); reuse across output-feature tiles.
        @pl.when(pl.program_id(2) == 0)
        def _():
            xs_ref[...] = build_shifted().astype(xs_ref.dtype)
        xs = xs_ref[...]
    else:
        xs = build_shifted().astype(w_ref.dtype)

    # Fused fn = Linear(D, D): (tm, D) @ (D, tn) on the MXU, f32 accumulate.
    acc = jnp.dot(xs, w_ref[...], preferred_element_type=jnp.float32)
    o_ref[0] = (acc + b_ref[...].astype(jnp.float32)).astype(o_ref.dtype)


# ------------------------------- the wrapper -------------------------------
def shift_tokens(x, w, b, shifts, mask=None, *, seq_tile=None, out_tile=None,
                 compute_dtype=None):
    B, N, D = x.shape
    assert w.shape == (D, D), "fn is modeled as Linear(D, D)"
    # torch: amount = min(amount, t.shape[1]) (positive shifts only)
    shifts = tuple(int(min(s, N)) if s > 0 else int(s) for s in shifts)
    n_seg = len(shifts)
    assert n_seg >= 1
    f = D // n_seg
    nonzero = [s for s in shifts if s != 0]
    max_shift = max((abs(s) for s in nonzero), default=0)
    assert max_shift <= N

    cx = jnp.dtype(x.dtype).itemsize
    cw = (jnp.dtype(compute_dtype).itemsize if compute_dtype is not None
          else jnp.dtype(w.dtype).itemsize)
    co = cx
    sub_mult = max(8, 32 // cx)              # f32: 8 rows/vreg, bf16: 16, ...

    has_mask = (mask is not None) and bool(nonzero)

    cap = _vmem_capacity_bytes()             # 128 MiB v5e/v6e, 64 MiB v7x
    budget = int(cap * 0.8)

    def halo_rows_for(tm_):
        if not nonzero or tm_ >= N:
            return 0
        hr = _round_up(max_shift, sub_mult)
        while hr < tm_ and tm_ % hr != 0:
            hr += sub_mult
        return min(hr, tm_)

    def est_bytes(tm_, tn_):
        hr = halo_rows_for(tm_)
        n_halo = (int(hr > 0 and any(s > 0 for s in nonzero))
                  + int(hr > 0 and any(s < 0 for s in nonzero)))
        bts = 2 * tm_ * D * cx                       # x tile (double-buffered)
        bts += 2 * n_halo * hr * D * cx              # halo rows only
        if has_mask:
            bts += 2 * (tm_ + n_halo * hr) * 4       # (.., 1) masks
        bts += 2 * D * tn_ * cw                      # weight (2 pipeline bufs)
        bts += 2 * tn_ * 4                           # bias
        bts += 2 * tm_ * tn_ * co                    # output
        bts += tm_ * D * max(cw, 4)                  # shifted tile / temporaries
        return bts

    # ---- tile selection (dtype- and VMEM-aware) ----
    if seq_tile is not None:
        tm = seq_tile
    else:
        tm = N if N <= 512 else _divisor_tile(N, 512, 8)
        if nonzero and max_shift > tm:
            tm = _smallest_divisor_tile(N, max_shift, sub_mult)
    if out_tile is not None:
        tn = out_tile
    else:
        tn = D                                       # try resident weight first
        if est_bytes(tm, tn) > budget:
            tn = _divisor_tile(D, 512, 128)
        while est_bytes(tm, tn) > budget and tn > 128 and tn % 256 == 0:
            tn //= 2
        while (est_bytes(tm, tn) > budget and seq_tile is None
               and tm % (2 * sub_mult) == 0):
            tm //= 2

    assert N % tm == 0 and (tm % 8 == 0 or tm == N), (N, tm)
    assert D % tn == 0 and (tn % 128 == 0 or tn == D), (D, tn)
    assert max_shift <= tm, "each |shift| must fit within one sequence tile"

    n_seq = N // tm
    n_out = D // tn
    halo_rows = halo_rows_for(tm)
    need_prev = halo_rows > 0 and any(s > 0 for s in nonzero)
    need_next = halo_rows > 0 and any(s < 0 for s in nonzero)
    has_out_axis = n_out > 1

    grid = (B, n_seq, n_out) if has_out_axis else (B, n_seq)

    def gmap(fn):
        if has_out_axis:
            return lambda bb, jj, nn: fn(bb, jj, nn)
        return lambda bb, jj: fn(bb, jj, 0)

    hb = tm // halo_rows if halo_rows else 1          # halo blocks per seq tile
    n_halo_blocks = N // halo_rows if halo_rows else 1

    in_specs = [pl.BlockSpec((1, tm, D), gmap(lambda bb, jj, nn: (bb, jj, 0)))]
    inputs = [x]
    if need_prev:
        in_specs.append(pl.BlockSpec(
            (1, halo_rows, D),
            gmap(lambda bb, jj, nn: (bb, jnp.maximum(jj * hb - 1, 0), 0))))
        inputs.append(x)
    if need_next:
        in_specs.append(pl.BlockSpec(
            (1, halo_rows, D),
            gmap(lambda bb, jj, nn:
                 (bb, jnp.minimum((jj + 1) * hb, n_halo_blocks - 1), 0))))
        inputs.append(x)
    if has_mask:
        mask3 = mask.reshape(B, N, 1).astype(jnp.float32)
        in_specs.append(pl.BlockSpec((1, tm, 1),
                                     gmap(lambda bb, jj, nn: (bb, jj, 0))))
        inputs.append(mask3)
        if need_prev:
            in_specs.append(pl.BlockSpec(
                (1, halo_rows, 1),
                gmap(lambda bb, jj, nn: (bb, jnp.maximum(jj * hb - 1, 0), 0))))
            inputs.append(mask3)
        if need_next:
            in_specs.append(pl.BlockSpec(
                (1, halo_rows, 1),
                gmap(lambda bb, jj, nn:
                     (bb, jnp.minimum((jj + 1) * hb, n_halo_blocks - 1), 0))))
            inputs.append(mask3)

    w_in = w if compute_dtype is None else w.astype(compute_dtype)
    b2 = b.reshape(1, D).astype(jnp.float32)
    # resident weight (n_out == 1): constant block index -> single HBM fetch
    in_specs.append(pl.BlockSpec((D, tn), gmap(lambda bb, jj, nn: (0, nn))))
    in_specs.append(pl.BlockSpec((1, tn), gmap(lambda bb, jj, nn: (0, nn))))
    inputs += [w_in, b2]

    out_spec = pl.BlockSpec((1, tm, tn), gmap(lambda bb, jj, nn: (bb, jj, nn)))

    xs_dtype = compute_dtype if compute_dtype is not None else x.dtype
    scratch = [pltpu.VMEM((tm, D), xs_dtype)] if has_out_axis else []

    kernel = functools.partial(
        _shift_tokens_kernel,
        shifts=shifts, f=f, tm=tm, halo_rows=halo_rows, seq_len=N,
        need_prev=need_prev, need_next=need_next, has_mask=has_mask,
        xs_in_scratch=has_out_axis)

    halo_frac = ((int(need_prev) + int(need_next))
                 * (halo_rows / tm if halo_rows else 0.0))
    w_reads = 1 if n_out == 1 else B * n_seq * n_out
    cost = pl.CostEstimate(
        flops=2 * B * N * D * D,
        transcendentals=0,
        bytes_accessed=int(B * N * D * cx * (1 + halo_frac)
                           + (B * N * 4 * (1 + halo_frac) if has_mask else 0)
                           + w_reads * D * tn * cw + D * 4
                           + B * N * D * co))

    est = est_bytes(tm, tn)
    vmem_limit = int(min(max(int(est * 1.5) + (4 << 20), 32 << 20),
                         int(cap * 0.9)))

    dims = ("parallel", "parallel", "arbitrary")[:(3 if has_out_axis else 2)]

    return pl.pallas_call(
        kernel,
        out_shape=jax.ShapeDtypeStruct((B, N, D), x.dtype),
        grid_spec=pltpu.PrefetchScalarGridSpec(
            num_scalar_prefetch=0,
            grid=grid,
            in_specs=in_specs,
            out_specs=out_spec,
            scratch_shapes=scratch),
        compiler_params=pltpu.CompilerParams(
            dimension_semantics=dims,
            vmem_limit_bytes=vmem_limit),
        cost_estimate=cost,
    )(*inputs)


# ----------------- pure-JAX reference (torch semantics) -----------------
def _shift_ref(t, amount, mask):
    if amount == 0:
        return t
    amount = min(amount, t.shape[1])
    if mask is not None:
        t = jnp.where(mask[..., None], t, jnp.zeros_like(t))
    B, N, F = t.shape
    if amount > 0:
        return jnp.concatenate(
            [jnp.zeros((B, amount, F), t.dtype), t[:, :N - amount]], axis=1)
    a = -amount
    return jnp.concatenate(
        [t[:, a:], jnp.zeros((B, a, F), t.dtype)], axis=1)


def shift_tokens_ref(x, w, b, shifts, mask=None):
    segments = len(shifts)
    f = x.shape[-1] // segments
    segs = [x[..., i * f:(i + 1) * f] for i in range(segments)]
    rest = x[..., segments * f:]
    segs = [_shift_ref(s, a, mask) for s, a in zip(segs, shifts)]
    parts = segs + ([rest] if rest.shape[-1] else [])
    x_new = jnp.concatenate(parts, axis=-1)
    return x_new @ w + b.reshape(1, -1)


if __name__ == "__main__":
    root = jax.random.PRNGKey(0)

    def run_case(B, N, D, shifts, *, seq_tile=None, out_tile=None,
                 compute_dtype=None, use_mask=True, atol=1e-3, rtol=1e-3):
        kx, kw, kb, km = jax.random.split(root, 4)
        x = jax.random.normal(kx, (B, N, D), dtype=jnp.float32)
        w = jax.random.normal(kw, (D, D), dtype=jnp.float32) * 0.05
        b = jax.random.normal(kb, (1, D), dtype=jnp.float32) * 0.01
        mask_bool = (jax.random.uniform(km, (B, N)) > 0.2) if use_mask else None
        mask_in = mask_bool.astype(jnp.float32) if use_mask else None

        out = shift_tokens(x, w, b, shifts, mask=mask_in,
                           seq_tile=seq_tile, out_tile=out_tile,
                           compute_dtype=compute_dtype)
        out = jax.block_until_ready(out)
        ref = shift_tokens_ref(x, w, b, shifts, mask=mask_bool)
        assert out.shape == ref.shape
        assert jnp.allclose(out, ref, atol=atol, rtol=rtol), \
            f"mismatch for shifts={shifts} compute_dtype={compute_dtype}"

    # 1) tiled output features (mode B), full-tile halo (halo_rows == tm)
    run_case(2, 16, 256, (0, 1), seq_tile=8, out_tile=128)
    # 2) both halos, small-halo (halo_rows=8 < tm=16) concat path, mode B
    run_case(2, 32, 384, (-1, 0, 1), seq_tile=16, out_tile=128)
    # 3) tiny problem, no mask, defaults -> collapsed grid, resident weight
    run_case(2, 8, 32, (0, 1), use_mask=False)
    # 4) bf16 MXU operands with f32 accumulation, defaults (resident weight)
    run_case(2, 16, 256, (0, 1), compute_dtype=jnp.bfloat16,
             atol=0.1, rtol=0.1)
    # 5) resident weight + positive-shift halo, 2-D grid (B, n_seq)
    run_case(1, 32, 256, (0, 1), seq_tile=8)
    # 6) resident weight + both small halos (concat path), 2-D grid
    run_case(1, 32, 384, (-1, 0, 1), seq_tile=16)

    print("KERNEL_OK")
</pallas_src>

<mosaic_0001>
module attributes {stable_mosaic.version = 11 : i64} {
  func.func @_shift_tokens_kernel(%arg0: i32, %arg1: i32, %arg2: i32, %arg3: memref<1x8x256xf32, #tpu.memory_space<vmem>>, %arg4: memref<1x8x256xf32, #tpu.memory_space<vmem>>, %arg5: memref<1x8x1xf32, #tpu.memory_space<vmem>>, %arg6: memref<1x8x1xf32, #tpu.memory_space<vmem>>, %arg7: memref<256x128xf32, #tpu.memory_space<vmem>>, %arg8: memref<1x128xf32, #tpu.memory_space<vmem>>, %arg9: memref<1x8x128xf32, #tpu.memory_space<vmem>>, %arg10: memref<8x256xf32, #tpu.memory_space<vmem>>) attributes {dimension_semantics = [#tpu.dimension_semantics<parallel>, #tpu.dimension_semantics<parallel>, #tpu.dimension_semantics<arbitrary>], iteration_bounds = array<i64: 2, 2, 2>, scalar_prefetch = 0 : i64, scratch_operands = 1 : i64, tpu.core_type = #tpu.core_type<tc>, window_params = [{transform_indices = @transform_0, window_bounds = array<i64: 1, 8, 256>}, {transform_indices = @transform_1, window_bounds = array<i64: 1, 8, 256>}, {transform_indices = @transform_2, window_bounds = array<i64: 1, 8, 1>}, {transform_indices = @transform_3, window_bounds = array<i64: 1, 8, 1>}, {transform_indices = @transform_4, window_bounds = array<i64: 256, 128>}, {transform_indices = @transform_5, window_bounds = array<i64: 1, 128>}, {transform_indices = @transform_6, window_bounds = array<i64: 1, 8, 128>}]} {
    %c0_i32 = arith.constant 0 : i32
    %0 = arith.cmpi eq, %arg2, %c0_i32 : i32
    %1 = arith.extui %0 : i1 to i32
    %c0_i32_0 = arith.constant 0 : i32
    %2 = arith.cmpi ne, %1, %c0_i32_0 : i32
    scf.if %2 {
      %c0_9 = arith.constant 0 : index
      %c0_10 = arith.constant 0 : index
      %c0_11 = arith.constant 0 : index
      %12 = vector.load %arg3[%c0_9, %c0_10, %c0_11] : memref<1x8x256xf32, #tpu.memory_space<vmem>>, vector<1x8x256xf32>
      %13 = vector.shape_cast %12 : vector<1x8x256xf32> to vector<8x256xf32>
      %c0_12 = arith.constant 0 : index
      %c0_13 = arith.constant 0 : index
      %c0_14 = arith.constant 0 : index
      %14 = vector.load %arg5[%c0_12, %c0_13, %c0_14] : memref<1x8x1xf32, #tpu.memory_space<vmem>>, vector<1x8x1xf32>
      %15 = vector.shape_cast %14 : vector<1x8x1xf32> to vector<8x1xf32>
      %cst_15 = arith.constant 0.000000e+00 : f32
      %16 = vector.broadcast %cst_15 : f32 to vector<8x1xf32>
      %17 = arith.cmpf one, %15, %16 : vector<8x1xf32>
      %cst_16 = arith.constant 0.000000e+00 : f32
      %18 = vector.broadcast %cst_16 : f32 to vector<8x256xf32>
      %19 = vector.shape_cast %17 : vector<8x1xi1> to vector<8x1xi1>
      %20 = vector.broadcast %19 : vector<8x1xi1> to vector<8x256xi1>
      %21 = arith.select %20, %13, %18 : vector<8x256xi1>, vector<8x256xf32>
      %c0_17 = arith.constant 0 : index
      %c0_18 = arith.constant 0 : index
      %c0_19 = arith.constant 0 : index
      %22 = vector.load %arg4[%c0_17, %c0_18, %c0_19] : memref<1x8x256xf32, #tpu.memory_space<vmem>>, vector<1x8x256xf32>
      %23 = vector.shape_cast %22 : vector<1x8x256xf32> to vector<8x256xf32>
      %c0_20 = arith.constant 0 : index
      %c0_21 = arith.constant 0 : index
      %c0_22 = arith.constant 0 : index
      %24 = vector.load %arg6[%c0_20, %c0_21, %c0_22] : memref<1x8x1xf32, #tpu.memory_space<vmem>>, vector<1x8x1xf32>
      %25 = vector.shape_cast %24 : vector<1x8x1xf32> to vector<8x1xf32>
      %cst_23 = arith.constant 0.000000e+00 : f32
      %26 = vector.broadcast %cst_23 : f32 to vector<8x1xf32>
      %27 = arith.cmpf one, %25, %26 : vector<8x1xf32>
      %cst_24 = arith.constant 0.000000e+00 : f32
      %28 = vector.broadcast %cst_24 : f32 to vector<8x256xf32>
      %29 = vector.shape_cast %27 : vector<8x1xi1> to vector<8x1xi1>
      %30 = vector.broadcast %29 : vector<8x1xi1> to vector<8x256xi1>
      %31 = arith.select %30, %23, %28 : vector<8x256xi1>, vector<8x256xf32>
      %32 = tpu.iota {dimensions = array<i32: 0>} : vector<8x1xi32>
      %c8_i32 = arith.constant 8 : i32
      %33 = arith.muli %arg1, %c8_i32 : i32
      %34 = vector.broadcast %33 : i32 to vector<8x1xi32>
      %35 = arith.addi %32, %34 : vector<8x1xi32>
      %36 = tpu.iota {dimensions = array<i32: 1>} : vector<1x256xi32>
      %c1_i32 = arith.constant 1 : i32
      %37 = tpu.dynamic_rotate %21 by %c1_i32 dim 0 : vector<8x256xf32>, i32 -> vector<8x256xf32>
      %c1_i32_25 = arith.constant 1 : i32
      %38 = tpu.dynamic_rotate %31 by %c1_i32_25 dim 0 : vector<8x256xf32>, i32 -> vector<8x256xf32>
      %c1_i32_26 = arith.constant 1 : i32
      %39 = vector.broadcast %c1_i32_26 : i32 to vector<8x1xi32>
      %40 = arith.cmpi slt, %32, %39 : vector<8x1xi32>
      %41 = vector.shape_cast %40 : vector<8x1xi1> to vector<8x1xi1>
      %42 = vector.broadcast %41 : vector<8x1xi1> to vector<8x256xi1>
      %43 = arith.select %42, %38, %37 : vector<8x256xi1>, vector<8x256xf32>
      %c1_i32_27 = arith.constant 1 : i32
      %44 = vector.broadcast %c1_i32_27 : i32 to vector<8x1xi32>
      %45 = arith.cmpi sge, %35, %44 : vector<8x1xi32>
      %cst_28 = arith.constant 0.000000e+00 : f32
      %46 = vector.broadcast %cst_28 : f32 to vector<8x256xf32>
      %47 = vector.shape_cast %45 : vector<8x1xi1> to vector<8x1xi1>
      %48 = vector.broadcast %47 : vector<8x1xi1> to vector<8x256xi1>
      %49 = arith.select %48, %43, %46 : vector<8x256xi1>, vector<8x256xf32>
      %c128_i32 = arith.constant 128 : i32
      %50 = vector.broadcast %c128_i32 : i32 to vector<1x256xi32>
      %51 = arith.cmpi sge, %36, %50 : vector<1x256xi32>
      %c256_i32 = arith.constant 256 : i32
      %52 = vector.broadcast %c256_i32 : i32 to vector<1x256xi32>
      %53 = arith.cmpi slt, %36, %52 : vector<1x256xi32>
      %54 = arith.andi %51, %53 : vector<1x256xi1>
      %55 = vector.shape_cast %54 : vector<1x256xi1> to vector<1x256xi1>
      %56 = vector.broadcast %55 : vector<1x256xi1> to vector<8x256xi1>
      %57 = arith.select %56, %49, %13 : vector<8x256xi1>, vector<8x256xf32>
      %c0_29 = arith.constant 0 : index
      %c0_30 = arith.constant 0 : index
      %58 = vector.load %arg10[%c0_29, %c0_30] : memref<8x256xf32, #tpu.memory_space<vmem>>, vector<8x256xf32>
      tpu.vector_store %arg10[%c0_29, %c0_30], %57 {strides = array<i32>} : memref<8x256xf32, #tpu.memory_space<vmem>>, vector<8x256xf32>,
    } else {
    }
    %c0 = arith.constant 0 : index
    %c0_1 = arith.constant 0 : index
    %3 = vector.load %arg10[%c0, %c0_1] : memref<8x256xf32, #tpu.memory_space<vmem>>, vector<8x256xf32>
    %c0_2 = arith.constant 0 : index
    %c0_3 = arith.constant 0 : index
    %4 = vector.load %arg7[%c0_2, %c0_3] : memref<256x128xf32, #tpu.memory_space<vmem>>, vector<256x128xf32>
    %cst = arith.constant dense<0.000000e+00> : vector<8x128xf32>
    %5 = tpu.matmul %3, %4, %cst {dimension_numbers = #tpu.dot_dimension_numbers<[1], [0], [0], [1], [0, 0, 1, 1], [], []>} : vector<8x256xf32>, vector<256x128xf32>, vector<8x128xf32> -> vector<8x128xf32>
    %c0_4 = arith.constant 0 : index
    %c0_5 = arith.constant 0 : index
    %6 = vector.load %arg8[%c0_4, %c0_5] : memref<1x128xf32, #tpu.memory_space<vmem>>, vector<1x128xf32>
    %7 = vector.broadcast %6 : vector<1x128xf32> to vector<8x128xf32>
    %8 = arith.addf %5, %7 : vector<8x128xf32>
    %c0_6 = arith.constant 0 : index
    %c0_7 = arith.constant 0 : index
    %c0_8 = arith.constant 0 : index
    %9 = vector.load %arg9[%c0_6, %c0_7, %c0_8] : memref<1x8x128xf32, #tpu.memory_space<vmem>>, vector<1x8x128xf32>
    %10 = vector.shape_cast %9 : vector<1x8x128xf32> to vector<8x128xf32>
    %11 = vector.shape_cast %8 : vector<8x128xf32> to vector<1x8x128xf32>
    tpu.vector_store %arg9[%c0_6, %c0_7, %c0_8], %11 {strides = array<i32>} : memref<1x8x128xf32, #tpu.memory_space<vmem>>, vector<1x8x128xf32>,
    return
  }
  func.func @transform_0(%arg0: i32, %arg1: i32, %arg2: i32) -> (i32, i32, i32) {
    %c0_i32 = arith.constant 0 : i32
    %c0_i32_0 = arith.constant 0 : i32
    return %arg0, %arg1, %c0_i32 : i32, i32, i32
  }
  func.func @transform_1(%arg0: i32, %arg1: i32, %arg2: i32) -> (i32, i32, i32) {
    %c1_i32 = arith.constant 1 : i32
    %0 = arith.muli %arg1, %c1_i32 : i32
    %c1_i32_0 = arith.constant 1 : i32
    %1 = arith.subi %0, %c1_i32_0 : i32
    %c0_i32 = arith.constant 0 : i32
    %2 = arith.maxsi %1, %c0_i32 : i32
    %c0_i32_1 = arith.constant 0 : i32
    %c0_i32_2 = arith.constant 0 : i32
    return %arg0, %2, %c0_i32_1 : i32, i32, i32
  }
  func.func @transform_2(%arg0: i32, %arg1: i32, %arg2: i32) -> (i32, i32, i32) {
    %c0_i32 = arith.constant 0 : i32
    %c0_i32_0 = arith.constant 0 : i32
    return %arg0, %arg1, %c0_i32 : i32, i32, i32
  }
  func.func @transform_3(%arg0: i32, %arg1: i32, %arg2: i32) -> (i32, i32, i32) {
    %c1_i32 = arith.constant 1 : i32
    %0 = arith.muli %arg1, %c1_i32 : i32
    %c1_i32_0 = arith.constant 1 : i32
    %1 = arith.subi %0, %c1_i32_0 : i32
    %c0_i32 = arith.constant 0 : i32
    %2 = arith.maxsi %1, %c0_i32 : i32
    %c0_i32_1 = arith.constant 0 : i32
    %c0_i32_2 = arith.constant 0 : i32
    return %arg0, %2, %c0_i32_1 : i32, i32, i32
  }
  func.func @transform_4(%arg0: i32, %arg1: i32, %arg2: i32) -> (i32, i32) {
    %c0_i32 = arith.constant 0 : i32
    %c0_i32_0 = arith.constant 0 : i32
    return %c0_i32, %arg2 : i32, i32
  }
  func.func @transform_5(%arg0: i32, %arg1: i32, %arg2: i32) -> (i32, i32) {
    %c0_i32 = arith.constant 0 : i32
    %c0_i32_0 = arith.constant 0 : i32
    return %c0_i32, %arg2 : i32, i32
  }
  func.func @transform_6(%arg0: i32, %arg1: i32, %arg2: i32) -> (i32, i32, i32) {
    %c0_i32 = arith.constant 0 : i32
    return %arg0, %arg1, %arg2 : i32, i32, i32
  }
}

</mosaic_0001>

<llo_original>
// kernel: tpu_custom_call.1
$region0: #{tpu_custom_call.1}
  #allocation0 [shape = 'u32[]', space=smem, size = 0x4, offset = 0x4, fixed_abs, tag = 'smem constant byte address 0x4 - core index']
  #allocation1 [shape = 'u32[144,128]{1,0:T(1,128)}', space=vmem, size = 0x12000, scoped, tag = 'internal scratch']
  #allocation2 [shape = 'f32[8,256]{1,0:T(8,128)}', space=vmem, size = 0x2000, scoped, tag = 'scratch operand']
  %s0 = inlined_call_operand.vmem [shape: f32[2,16,256], index: 0, kind: input, shape index: {}]
  %s1 = inlined_call_operand.hbm [shape: f32[2,16,256], index: 1, kind: input, shape index: {}]
  %s2 = inlined_call_operand.vmem [shape: f32[2,16,1], index: 2, kind: input, shape index: {}]
  %s3 = inlined_call_operand.vmem [shape: f32[2,16,1], index: 3, kind: input, shape index: {}]
  %s4 = inlined_call_operand.hbm [shape: f32[256,256], index: 4, kind: input, shape index: {}]
  %s5 = inlined_call_operand.vmem [shape: f32[1,256], index: 5, kind: input, shape index: {}]
  %s6 = inlined_call_operand.hbm [shape: f32[2,16,256], index: 6, kind: output, shape index: {}]
  %s7 = sld [smem:[#allocation0]]
  $region69: #{tpu_custom_call.1} parent=0
    _
  %s9 = ssub.s32 1, %s7
  %s10 = scalar_select 0, %s9, %s7
  $region1: #{tpu_custom_call.1} parent=0
    #allocation3 [shape = 'u8[16384]{0}', space=vmem, size = 0x4000, scoped, tag = 'input window, operand 1']
    #allocation4 [shape = 's32[2]{0}', space=sflag, size = 0x8, scoped, tag = 'scoped memory for tpu_custom_call.1']
    #allocation5 [shape = 's32[2]{0}', space=sflag, size = 0x8, scoped, tag = 'scoped memory for tpu_custom_call.1']
    #allocation6 [shape = 'u8[262144]{0}', space=vmem, size = 0x40000, scoped, tag = 'input window, operand 4']
    #allocation7 [shape = 's32[2]{0}', space=sflag, size = 0x8, scoped, tag = 'scoped memory for tpu_custom_call.1']
    #allocation8 [shape = 'u8[8192]{0}', space=vmem, size = 0x2000, scoped, tag = 'output window, operand 0']
    %11 = vsyncpa [#allocation4], 0
    %s12 = scalar_lea.sflag [#allocation4], 1
    %13 = vsyncpa %s12, 0
    %14 = vsyncpa [#allocation7], 0
    %s15 = scalar_lea.sflag [#allocation7], 1
    %16 = vsyncpa %s15, 0
    %17 = vsyncpa [#allocation5], 0
    %s18 = scalar_lea.sflag [#allocation5], 1
    %19 = vsyncpa %s18, 0
    loop: start=0, step=1, limit=10
    $region2: #{tpu_custom_call.1} parent=1 // loop_pre_header
      _
    $region3: #{tpu_custom_call.1} parent=1 // loop_header
      %s21 = sphi 0, %s25
      %p22 = scmp.ge.s32.totalorder %s21, 10
      %s28 = sphi 0, %s47
      %s29 = sphi 0, %s43
      %s30 = sphi 0, %s39
      %s31 = sphi 0, %s28
      %s32 = sphi 0, %s29
      %s33 = sphi 0, %s30
      %s34 = sphi 0, %s31
      %s35 = sphi 0, %s32
      %s36 = sphi 0, %s33
      %s52 = sphi 0, %s54
      %s55 = sphi 0, %s52
      %s56 = sphi 0, %s55
      %s72 = sphi 0, %s56
      %s86 = sphi 0, %s88
      %s89 = sphi 0, %s86
      %s90 = sphi 0, %s89
      %s106 = sphi 0, %s90
      %s114 = sphi 0, %s116
      %s117 = sphi 0, %s114
      %s118 = sphi 0, %s117
      %s134 = sphi 0, %s118
      %s148 = sphi 0, %s150
      %s151 = sphi 0, %s148
      %s152 = sphi 0, %s151
      %s168 = sphi 0, %s152
      %s174 = sphi 0, %s176
      %s177 = sphi 0, %s174
      %s178 = sphi 0, %s177
      %s194 = sphi 0, %s178
      %s200 = sphi 0, %s202
      %s203 = sphi 0, %s200
      %s204 = sphi 0, %s203
      %s220 = sphi 0, %s204
      %s230 = sphi 0, %s232
      %s233 = sphi 0, %s230
      %s234 = sphi 0, %s233
      %s250 = sphi 0, %s234
    $region4: #{tpu_custom_call.1} parent=1 // loop_header_branch
      %24 = sbr.rel (%p22) target = $region8
    $region5: #{tpu_custom_call.1} parent=1 // loop_body
      %s26 = ssub.s32 %s21, 1
      %s27 = ssub.s32 %s21, 2
      %s37 = sadd.s32 1, %s30
      %p38 = scmp.ge.s32.totalorder %s37, 2
      %s39 = scalar_select %p38, 0, %s37
      %s40 = sadd.s32 1, %s29
      %s41 = scalar_select %p38, %s40, %s29
      %p42 = scmp.ge.s32.totalorder %s41, 2
      %s43 = scalar_select %p42, 0, %s41
      %s44 = sadd.s32 1, %s28
      %s45 = scalar_select %p42, %s44, %s28
      %p46 = scmp.ge.s32.totalorder %s45, 2
      %s47 = scalar_select %p46, 0, %s45
      %s48 = ssub.s32 %s28, %s47
      %s49 = ssub.s32 %s29, %s43
      %s50 = sor.u32 %s48, %s49
      %p51 = scmp.eq.s32.totalorder %s50, 0
      %s53 = sadd.s32 %s52, 1
      %s54 = scalar_select %p51, %s52, %s53
      %p57 = pneg %p51
      %p58 = scmp.eq.s32.totalorder %s21, 7
      %p59 = por %p57, %p58
      %p60 = scmp.ne.s32.totalorder %s52, %s55
      %p61 = scmp.eq.s32.totalorder %s21, 0
      %p62 = por %p60, %p61
      %p63 = scmp.ne.s32.totalorder %s52, %s55
      %p64 = scmp.eq.s32.totalorder %s26, 7
      %p65 = por %p63, %p64
      %p66 = scmp.ne.s32.totalorder %s55, %s56
      %p67 = scmp.eq.s32.totalorder %s26, 0
      %p68 = por %p66, %p67
      %p69 = scmp.ne.s32.totalorder %s55, %s56
      %p70 = scmp.eq.s32.totalorder %s27, 7
      %p71 = por %p69, %p70
      %p73 = scmp.ne.s32.totalorder %s56, %s72
      %p74 = scmp.eq.s32.totalorder %s27, 0
      %p75 = por %p73, %p74
      %s76 = ssub.s32 %s29, 1
      %p77 = scmp.gt.s32.totalorder %s76, 0
      %s78 = scalar_select %p77, %s76, 0
      %s79 = ssub.s32 %s43, 1
      %p80 = scmp.gt.s32.totalorder %s79, 0
      %s81 = scalar_select %p80, %s79, 0
      %s82 = ssub.s32 %s28, %s47
      %s83 = ssub.s32 %s78, %s81
      %s84 = sor.u32 %s82, %s83
      %p85 = scmp.eq.s32.totalorder %s84, 0
      %s87 = sadd.s32 %s86, 1
      %s88 = scalar_select %p85, %s86, %s87
      %p91 = pneg %p85
      %p92 = scmp.eq.s32.totalorder %s21, 7
      %p93 = por %p91, %p92
      %p94 = scmp.ne.s32.totalorder %s86, %s89
      %p95 = scmp.eq.s32.totalorder %s21, 0
      %p96 = por %p94, %p95
      %p97 = scmp.ne.s32.totalorder %s86, %s89
      %p98 = scmp.eq.s32.totalorder %s26, 7
      %p99 = por %p97, %p98
      %p100 = scmp.ne.s32.totalorder %s89, %s90
      %p101 = scmp.eq.s32.totalorder %s26, 0
      %p102 = por %p100, %p101
      %p103 = scmp.ne.s32.totalorder %s89, %s90
      %p104 = scmp.eq.s32.totalorder %s27, 7
      %p105 = por %p103, %p104
      %p107 = scmp.ne.s32.totalorder %s90, %s106
      %p108 = scmp.eq.s32.totalorder %s27, 0
      %p109 = por %p107, %p108
      %s110 = ssub.s32 %s28, %s47
      %s111 = ssub.s32 %s29, %s43
      %s112 = sor.u32 %s110, %s111
      %p113 = scmp.eq.s32.totalorder %s112, 0
      %s115 = sadd.s32 %s114, 1
      %s116 = scalar_select %p113, %s114, %s115
      %p119 = pneg %p113
      %p120 = scmp.eq.s32.totalorder %s21, 7
      %p121 = por %p119, %p120
      %p122 = scmp.ne.s32.totalorder %s114, %s117
      %p123 = scmp.eq.s32.totalorder %s21, 0
      %p124 = por %p122, %p123
      %p125 = scmp.ne.s32.totalorder %s114, %s117
      %p126 = scmp.eq.s32.totalorder %s26, 7
      %p127 = por %p125, %p126
      %p128 = scmp.ne.s32.totalorder %s117, %s118
      %p129 = scmp.eq.s32.totalorder %s26, 0
      %p130 = por %p128, %p129
      %p131 = scmp.ne.s32.totalorder %s117, %s118
      %p132 = scmp.eq.s32.totalorder %s27, 7
      %p133 = por %p131, %p132
      %p135 = scmp.ne.s32.totalorder %s118, %s134
      %p136 = scmp.eq.s32.totalorder %s27, 0
      %p137 = por %p135, %p136
      %s138 = ssub.s32 %s29, 1
      %p139 = scmp.gt.s32.totalorder %s138, 0
      %s140 = scalar_select %p139, %s138, 0
      %s141 = ssub.s32 %s43, 1
      %p142 = scmp.gt.s32.totalorder %s141, 0
      %s143 = scalar_select %p142, %s141, 0
      %s144 = ssub.s32 %s28, %s47
      %s145 = ssub.s32 %s140, %s143
      %s146 = sor.u32 %s144, %s145
      %p147 = scmp.eq.s32.totalorder %s146, 0
      %s149 = sadd.s32 %s148, 1
      %s150 = scalar_select %p147, %s148, %s149
      %p153 = pneg %p147
      %p154 = scmp.eq.s32.totalorder %s21, 7
      %p155 = por %p153, %p154
      %p156 = scmp.ne.s32.totalorder %s148, %s151
      %p157 = scmp.eq.s32.totalorder %s21, 0
      %p158 = por %p156, %p157
      %p159 = scmp.ne.s32.totalorder %s148, %s151
      %p160 = scmp.eq.s32.totalorder %s26, 7
      %p161 = por %p159, %p160
      %p162 = scmp.ne.s32.totalorder %s151, %s152
      %p163 = scmp.eq.s32.totalorder %s26, 0
      %p164 = por %p162, %p163
      %p165 = scmp.ne.s32.totalorder %s151, %s152
      %p166 = scmp.eq.s32.totalorder %s27, 7
      %p167 = por %p165, %p166
      %p169 = scmp.ne.s32.totalorder %s152, %s168
      %p170 = scmp.eq.s32.totalorder %s27, 0
      %p171 = por %p169, %p170
      %s172 = ssub.s32 %s30, %s39
      %p173 = scmp.eq.s32.totalorder %s172, 0
      %s175 = sadd.s32 %s174, 1
      %s176 = scalar_select %p173, %s174, %s175
      %p179 = pneg %p173
      %p180 = scmp.eq.s32.totalorder %s21, 7
      %p181 = por %p179, %p180
      %p182 = scmp.ne.s32.totalorder %s174, %s177
      %p183 = scmp.eq.s32.totalorder %s21, 0
      %p184 = por %p182, %p183
      %p185 = scmp.ne.s32.totalorder %s174, %s177
      %p186 = scmp.eq.s32.totalorder %s26, 7
      %p187 = por %p185, %p186
      %p188 = scmp.ne.s32.totalorder %s177, %s178
      %p189 = scmp.eq.s32.totalorder %s26, 0
      %p190 = por %p188, %p189
      %p191 = scmp.ne.s32.totalorder %s177, %s178
      %p192 = scmp.eq.s32.totalorder %s27, 7
      %p193 = por %p191, %p192
      %p195 = scmp.ne.s32.totalorder %s178, %s194
      %p196 = scmp.eq.s32.totalorder %s27, 0
      %p197 = por %p195, %p196
      %s198 = ssub.s32 %s30, %s39
      %p199 = scmp.eq.s32.totalorder %s198, 0
      %s201 = sadd.s32 %s200, 1
      %s202 = scalar_select %p199, %s200, %s201
      %p205 = pneg %p199
      %p206 = scmp.eq.s32.totalorder %s21, 7
      %p207 = por %p205, %p206
      %p208 = scmp.ne.s32.totalorder %s200, %s203
      %p209 = scmp.eq.s32.totalorder %s21, 0
      %p210 = por %p208, %p209
      %p211 = scmp.ne.s32.totalorder %s200, %s203
      %p212 = scmp.eq.s32.totalorder %s26, 7
      %p213 = por %p211, %p212
      %p214 = scmp.ne.s32.totalorder %s203, %s204
      %p215 = scmp.eq.s32.totalorder %s26, 0
      %p216 = por %p214, %p215
      %p217 = scmp.ne.s32.totalorder %s203, %s204
      %p218 = scmp.eq.s32.totalorder %s27, 7
      %p219 = por %p217, %p218
      %p221 = scmp.ne.s32.totalorder %s204, %s220
      %p222 = scmp.eq.s32.totalorder %s27, 0
      %p223 = por %p221, %p222
      %s224 = ssub.s32 %s28, %s47
      %s225 = ssub.s32 %s29, %s43
      %s226 = sor.u32 %s224, %s225
      %s227 = ssub.s32 %s30, %s39
      %s228 = sor.u32 %s226, %s227
      %p229 = scmp.eq.s32.totalorder %s228, 0
      %s231 = sadd.s32 %s230, 1
      %s232 = scalar_select %p229, %s230, %s231
      %p235 = pneg %p229
      %p236 = scmp.eq.s32.totalorder %s21, 7
      %p237 = por %p235, %p236
      %p238 = scmp.ne.s32.totalorder %s230, %s233
      %p239 = scmp.eq.s32.totalorder %s21, 0
      %p240 = por %p238, %p239
      %p241 = scmp.ne.s32.totalorder %s230, %s233
      %p242 = scmp.eq.s32.totalorder %s26, 7
      %p243 = por %p241, %p242
      %p244 = scmp.ne.s32.totalorder %s233, %s234
      %p245 = scmp.eq.s32.totalorder %s26, 0
      %p246 = por %p244, %p245
      %p247 = scmp.ne.s32.totalorder %s233, %s234
      %p248 = scmp.eq.s32.totalorder %s27, 7
      %p249 = por %p247, %p248
      %p251 = scmp.ne.s32.totalorder %s234, %s250
      %p252 = scmp.eq.s32.totalorder %s27, 0
      %p253 = por %p251, %p252
      %p254 = scmp.le.s32.totalorder 1, %s21
      %p255 = scmp.lt.s32.totalorder %s21, 9
      %p256 = pnand %p254, %p255
      %p257 = pneg %p256
      // Predicated region
      $region9: #{tpu_custom_call.1} parent=5 // pred_check
        _
      $region10: #{tpu_custom_call.1} parent=5 // pred_check_branch
        %259 = sbr.rel (%p256) target = $region12
      $region11: #{tpu_custom_call.1} parent=5 // pred_region
        %s260 = ssub.s32 %s21, 1
      $region12: #{tpu_custom_call.1} parent=5 // pred_fallthru
        _
      %p261 = scmp.lt.s32.totalorder %s21, 8
      // Predicated region
      $region13: #{tpu_custom_call.1} parent=5 // pred_check
        %p262 = pneg %p261
      $region14: #{tpu_custom_call.1} parent=5 // pred_check_branch
        %264 = sbr.rel (%p262) target = $region16
      $region15: #{tpu_custom_call.1} parent=5 // pred_region
        // Predicated region
        $region17: #{tpu_custom_call.1} parent=15 // pred_check
          %p265 = pneg %p62
        $region18: #{tpu_custom_call.1} parent=15 // pred_check_branch
          %267 = sbr.rel (%p265) target = $region20
        $region19: #{tpu_custom_call.1} parent=15 // pred_region
          %p268 = scmp.lt.s32.totalorder %s28, 1
          %s269 = scalar_select %p268, %s28, 1
          %p270 = scmp.lt.s32.totalorder %s29, 1
          %s271 = scalar_select %p270, %s29, 1
          %s272 = smul.addr %s271, 2
          %s273 = smul.addr %s269, 4
          %s274 = sadd.s32 %s272, %s273
          %s275 = smul.addr %s274, 8
          %s276 = scalar_lea.vmem %s0, %s275
        $region20: #{tpu_custom_call.1} parent=15 // pred_fallthru
          _
        // Predicated region
        $region21: #{tpu_custom_call.1} parent=15 // pred_check
          %p277 = pneg %p96
        $region22: #{tpu_custom_call.1} parent=15 // pred_check_branch
          %279 = sbr.rel (%p277) target = $region24
        $region23: #{tpu_custom_call.1} parent=15 // pred_region
          %s280 = sand.u32 %s86, 1
          %s281 = scalar_lea.sflag [#allocation4], %s280
          %s282 = sand.u32 %s86, 1
          %s283 = smul.addr %s282, 16
          %s284 = scalar_lea.vmem [#allocation3], %s283
          %s285 = ssub.s32 %s29, 1
          %p286 = scmp.gt.s32.totalorder %s285, 0
          %s287 = scalar_select %p286, %s285, 0
          %s289 = ssub.s32 256, 256
          %290 = vsyncadd %s281, %s289
          %s291 = smul.addr %s287, 2
          %s292 = smul.addr %s28, 4
          %s293 = sadd.s32 %s291, %s292
          %s294 = smul.addr %s293, 128
          %s295 = scalar_lea.hbm %s1, %s294
          %s297 = sshll.u32 %s284, 4
          %s298 = int_to_ptr.vmem [resolvable:$true] %s297
          %300 = dma.hbm_to_vmem [thread:$0]  %s295, 256, %s298, %s281
        $region24: #{tpu_custom_call.1} parent=15 // pred_fallthru
          _
        // Predicated region
        $region25: #{tpu_custom_call.1} parent=15 // pred_check
          %p301 = pneg %p124
        $region26: #{tpu_custom_call.1} parent=15 // pred_check_branch
          %303 = sbr.rel (%p301) target = $region28
        $region27: #{tpu_custom_call.1} parent=15 // pred_region
          %p304 = scmp.lt.s32.totalorder %s28, 1
          %s305 = scalar_select %p304, %s28, 1
          %p306 = scmp.lt.s32.totalorder %s29, 1
          %s307 = scalar_select %p306, %s29, 1
          %s308 = smul.addr %s305, 2
          %s309 = sadd.s32 %s307, %s308
          %s310 = smul.addr %s309, 8
          %s311 = scalar_lea.vmem %s2, %s310
        $region28: #{tpu_custom_call.1} parent=15 // pred_fallthru
          _
        // Predicated region
        $region29: #{tpu_custom_call.1} parent=15 // pred_check
          %p312 = pneg %p158
        $region30: #{tpu_custom_call.1} parent=15 // pred_check_branch
          %314 = sbr.rel (%p312) target = $region32
        $region31: #{tpu_custom_call.1} parent=15 // pred_region
          %s315 = ssub.s32 %s29, 1
          %p316 = scmp.gt.s32.totalorder %s315, 0
          %s317 = scalar_select %p316, %s315, 0
          %p318 = scmp.lt.s32.totalorder %s28, 1
          %s319 = scalar_select %p318, %s28, 1
          %p320 = scmp.lt.s32.totalorder %s317, 1
          %s321 = scalar_select %p320, %s317, 1
          %s322 = smul.addr %s319, 2
          %s323 = sadd.s32 %s321, %s322
          %s324 = smul.addr %s323, 8
          %s325 = scalar_lea.vmem %s3, %s324
          %s326 = ssub.s32 %s29, 1
          %p327 = scmp.gt.s32.totalorder %s326, 0
          %s328 = scalar_select %p327, %s326, 0
        $region32: #{tpu_custom_call.1} parent=15 // pred_fallthru
          _
        // Predicated region
        $region33: #{tpu_custom_call.1} parent=15 // pred_check
          %p329 = pneg %p184
        $region34: #{tpu_custom_call.1} parent=15 // pred_check_branch
          %331 = sbr.rel (%p329) target = $region36
        $region35: #{tpu_custom_call.1} parent=15 // pred_region
          %s332 = sand.u32 %s174, 1
          %s333 = scalar_lea.sflag [#allocation7], %s332
          %s334 = sand.u32 %s174, 1
          %s335 = smul.addr %s334, 256
          %s336 = scalar_lea.vmem [#allocation6], %s335
          %s338 = ssub.s32 4096, 4096
          %339 = vsyncadd %s333, %s338
          %s340 = smul.addr %s30, 128
          %s341 = scalar_lea.hbm %s4, %s340
          %s342 = sshll.u32 %s336, 4
          %s343 = int_to_ptr.vmem [resolvable:$true] %s342
          %348 = dma.hbm_to_vmem [thread:$0]  %s341, 4096, %s343, %s333, 256, 128, 8
        $region36: #{tpu_custom_call.1} parent=15 // pred_fallthru
          _
        // Predicated region
        $region37: #{tpu_custom_call.1} parent=15 // pred_check
          %p349 = pneg %p210
        $region38: #{tpu_custom_call.1} parent=15 // pred_check_branch
          %351 = sbr.rel (%p349) target = $region40
        $region39: #{tpu_custom_call.1} parent=15 // pred_region
          %p352 = scmp.lt.s32.totalorder %s30, 1
          %s353 = scalar_select %p352, %s30, 1
          %s354 = scalar_lea.vmem %s5, %s353
        $region40: #{tpu_custom_call.1} parent=15 // pred_fallthru
          _
      $region16: #{tpu_custom_call.1} parent=5 // pred_fallthru
        _
      %p355 = scmp.le.s32.totalorder 1, %s21
      %p356 = scmp.lt.s32.totalorder %s21, 9
      %p357 = pnand %p355, %p356
      %p358 = pneg %p357
      // Predicated region
      $region41: #{tpu_custom_call.1} parent=5 // pred_check
        _
      $region42: #{tpu_custom_call.1} parent=5 // pred_check_branch
        %360 = sbr.rel (%p357) target = $region44
      $region43: #{tpu_custom_call.1} parent=5 // pred_region
        %s361 = ssub.s32 %s21, 1
        %s362 = sand.u32 %s89, 1
        %s363 = scalar_lea.sflag [#allocation4], %s362
        %s364 = sand.u32 %s89, 1
        %s365 = smul.addr %s364, 16
        %s366 = scalar_lea.vmem [#allocation3], %s365
        // Predicated region
        $region45: #{tpu_custom_call.1} parent=43 // pred_check
          %p367 = pneg %p102
        $region46: #{tpu_custom_call.1} parent=43 // pred_check_branch
          %369 = sbr.rel (%p367) target = $region48
        $region47: #{tpu_custom_call.1} parent=43 // pred_region
          %370 = dma.done %s363, 256
        $region48: #{tpu_custom_call.1} parent=43 // pred_fallthru
          _
        %s371 = sand.u32 %s177, 1
        %s372 = scalar_lea.sflag [#allocation7], %s371
        %s373 = sand.u32 %s177, 1
        %s374 = smul.addr %s373, 256
        %s375 = scalar_lea.vmem [#allocation6], %s374
        // Predicated region
        $region49: #{tpu_custom_call.1} parent=43 // pred_check
          %p376 = pneg %p190
        $region50: #{tpu_custom_call.1} parent=43 // pred_check_branch
          %378 = sbr.rel (%p376) target = $region52
        $region51: #{tpu_custom_call.1} parent=43 // pred_region
          %379 = dma.done %s372, 4096
        $region52: #{tpu_custom_call.1} parent=43 // pred_fallthru
          _
        %p380 = scmp.lt.s32.totalorder %s31, 1
        %s381 = scalar_select %p380, %s31, 1
        %p382 = scmp.lt.s32.totalorder %s32, 1
        %s383 = scalar_select %p382, %s32, 1
        %s384 = smul.addr %s383, 2
        %s385 = smul.addr %s381, 4
        %s386 = sadd.s32 %s384, %s385
        %s387 = smul.addr %s386, 8
        %s388 = scalar_lea.vmem %s0, %s387
        %p389 = pneg %p68
        %p390 = pneg %p65
        %s391 = sand.u32 %s89, 1
        %s392 = scalar_lea.sflag [#allocation4], %s391
        %s393 = sand.u32 %s89, 1
        %s394 = smul.addr %s393, 16
        %s395 = scalar_lea.vmem [#allocation3], %s394
        %p396 = pneg %p102
        %p397 = pneg %p99
        %p398 = scmp.lt.s32.totalorder %s31, 1
        %s399 = scalar_select %p398, %s31, 1
        %p400 = scmp.lt.s32.totalorder %s32, 1
        %s401 = scalar_select %p400, %s32, 1
        %s402 = smul.addr %s399, 2
        %s403 = sadd.s32 %s401, %s402
        %s404 = smul.addr %s403, 8
        %s405 = scalar_lea.vmem %s2, %s404
        %p406 = pneg %p130
        %p407 = pneg %p127
        %s408 = ssub.s32 %s32, 1
        %p409 = scmp.gt.s32.totalorder %s408, 0
        %s410 = scalar_select %p409, %s408, 0
        %p411 = scmp.lt.s32.totalorder %s31, 1
        %s412 = scalar_select %p411, %s31, 1
        %p413 = scmp.lt.s32.totalorder %s410, 1
        %s414 = scalar_select %p413, %s410, 1
        %s415 = smul.addr %s412, 2
        %s416 = sadd.s32 %s414, %s415
        %s417 = smul.addr %s416, 8
        %s418 = scalar_lea.vmem %s3, %s417
        %p419 = pneg %p164
        %p420 = pneg %p161
        %s421 = sand.u32 %s177, 1
        %s422 = scalar_lea.sflag [#allocation7], %s421
        %s423 = sand.u32 %s177, 1
        %s424 = smul.addr %s423, 256
        %s425 = scalar_lea.vmem [#allocation6], %s424
        %p426 = pneg %p190
        %p427 = pneg %p187
        %p428 = scmp.lt.s32.totalorder %s33, 1
        %s429 = scalar_select %p428, %s33, 1
        %s430 = scalar_lea.vmem %s5, %s429
        %p431 = pneg %p216
        %p432 = pneg %p213
        %p433 = pneg %p246
        %p434 = pneg %p243
        %s435 = sand.u32 %s233, 1
        %s436 = scalar_lea.sflag [#allocation5], %s435
        %s437 = sand.u32 %s233, 1
        %s438 = smul.addr %s437, 8
        %s439 = scalar_lea.vmem [#allocation8], %s438
        %p440 = scmp.lt.s32.totalorder %s31, 1
        %s441 = scalar_select %p440, %s31, 1
        %p442 = scmp.lt.s32.totalorder %s32, 1
        %s443 = scalar_select %p442, %s32, 1
        %s444 = smul.addr %s443, 2
        %s445 = smul.addr %s441, 4
        %s446 = sadd.s32 %s444, %s445
        %s447 = smul.addr %s446, 8
        %s448 = scalar_lea.vmem %s0, %s447
        %s449 = ssub.s32 %s32, 1
        %p450 = scmp.gt.s32.totalorder %s449, 0
        %s451 = scalar_select %p450, %s449, 0
        %p452 = scmp.lt.s32.totalorder %s31, 1
        %s453 = scalar_select %p452, %s31, 1
        %p454 = scmp.lt.s32.totalorder %s32, 1
        %s455 = scalar_select %p454, %s32, 1
        %s456 = smul.addr %s453, 2
        %s457 = sadd.s32 %s455, %s456
        %s458 = smul.addr %s457, 8
        %s459 = scalar_lea.vmem %s2, %s458
        %s460 = ssub.s32 %s32, 1
        %p461 = scmp.gt.s32.totalorder %s460, 0
        %s462 = scalar_select %p461, %s460, 0
        %p463 = scmp.lt.s32.totalorder %s31, 1
        %s464 = scalar_select %p463, %s31, 1
        %p465 = scmp.lt.s32.totalorder %s462, 1
        %s466 = scalar_select %p465, %s462, 1
        %s467 = smul.addr %s464, 2
        %s468 = sadd.s32 %s466, %s467
        %s469 = smul.addr %s468, 8
        %s470 = scalar_lea.vmem %s3, %s469
        %s471 = ssub.s32 %s32, 1
        %p472 = scmp.gt.s32.totalorder %s471, 0
        %s473 = scalar_select %p472, %s471, 0
        %p474 = scmp.lt.s32.totalorder %s33, 1
        %s475 = scalar_select %p474, %s33, 1
        %s476 = scalar_lea.vmem %s5, %s475
        %p477 = scmp.eq.s32.totalorder %s33, 0
        // Predicated region
        $region53: #{tpu_custom_call.1} parent=43 // pred_check
          %p478 = pneg %p477
        $region54: #{tpu_custom_call.1} parent=43 // pred_check_branch
          %480 = sbr.rel (%p478) target = $region56
        $region55: #{tpu_custom_call.1} parent=43 // pred_region
          %v481 = vld [vmem:[%s448] sm:$0xff]
          %v482 = vld [vmem:[%s448 + $0x8] sm:$0xff]
          %v483 = vld [vmem:[%s459] sm:$0xff]
          %vm484 = vcmp.ne.f32.partialorder %v483, 0.0
          %v485 = vsel %vm484, 1, 0
          %486 = vset.pattern.permute.xlu0 0
          %487 = vperm.xlu0 %486, %v485
          %v488 = vpop.permute.xlu0 %487
          %vm489 = vcmp.eq.s32.totalorder %v488, 1
          %v490 = vsel %vm489, %v481, 0.0
          %v491 = vsel %vm489, %v482, 0.0
          %v492 = vld [vmem:[%s366] sm:$0xff]
          %v493 = vld [vmem:[%s366 + $0x8] sm:$0xff]
          %v494 = vld [vmem:[%s470] sm:$0xff]
          %vm495 = vcmp.ne.f32.partialorder %v494, 0.0
          %v496 = vsel %vm495, 1, 0
          %497 = vset.pattern.permute.xlu0 0
          %498 = vperm.xlu0 %497, %v496
          %v499 = vpop.permute.xlu0 %498
          %vm500 = vcmp.eq.s32.totalorder %v499, 1
          %v501 = vsel %vm500, %v492, 0.0
          %v502 = vsel %vm500, %v493, 0.0
          %v503 = vlaneseq
          %v504 = vshrl.u32 %v503, 7
          %s505 = smul.u32 %s32, 8
          %v506 = vstv %s505
          %v507 = vadd.s32 %v504, %v506
          %v508 = vlaneseq
          %v509 = vand.u32 %v508, 127
          %v510 = vadd.s32 %v509, 128
          %v511 = vrot.slane %v490, 7
          %v512 = vrot.slane %v491, 7
          %v513 = vrot.slane %v501, 7
          %v514 = vrot.slane %v502, 7
          %vm515 = vcmp.lt.s32.totalorder %v504, 1
          %v516 = vsel %vm515, 1, 0
          %vm517 = vcmp.eq.s32.totalorder %v516, 1
          %v518 = vsel %vm517, %v513, %v511
          %v519 = vsel %vm517, %v514, %v512
          %vm520 = vcmp.ge.s32.totalorder %v507, 1
          %v521 = vsel %vm520, 1, 0
          %vm522 = vcmp.eq.s32.totalorder %v521, 1
          %v523 = vsel %vm522, %v518, 0.0
          %v524 = vsel %vm522, %v519, 0.0
          %vm525 = vcmp.ge.s32.totalorder %v509, 128
          %vm526 = vcmp.ge.s32.totalorder %v510, 128
          %vm527 = vcmp.lt.s32.totalorder %v509, 256
          %vm528 = vcmp.lt.s32.totalorder %v510, 256
          %vm529 = vmand %vm525, %vm527
          %vm530 = vmand %vm526, %vm528
          %v531 = vsel %vm529, 1, 0
          %v532 = vsel %vm530, 1, 0
          %vm533 = vcmp.eq.s32.totalorder %v531, 1
          %vm534 = vcmp.eq.s32.totalorder %v532, 1
          %v535 = vsel %vm533, %v523, %v481
          %v536 = vsel %vm534, %v524, %v482
          %537 = vst [vmem:[#allocation2] sm:$0xff] %v535
          %538 = vst [vmem:[#allocation2 + $0x8] sm:$0xff] %v536
        $region56: #{tpu_custom_call.1} parent=43 // pred_fallthru
          _
        %v539 = vld [vmem:[#allocation2] sm:$0xff]
        %v540 = vld [vmem:[#allocation2 + $0x8] sm:$0xff]
        %v541 = vld [vmem:[%s375] sm:$0xff]
        %v542 = vld [vmem:[%s375 + $0x8] sm:$0xff]
        %v543 = vld [vmem:[%s375 + $0x10] sm:$0xff]
        %v544 = vld [vmem:[%s375 + $0x18] sm:$0xff]
        %v545 = vld [vmem:[%s375 + $0x20] sm:$0xff]
        %v546 = vld [vmem:[%s375 + $0x28] sm:$0xff]
        %v547 = vld [vmem:[%s375 + $0x30] sm:$0xff]
        %v548 = vld [vmem:[%s375 + $0x38] sm:$0xff]
        %v549 = vld [vmem:[%s375 + $0x40] sm:$0xff]
        %v550 = vld [vmem:[%s375 + $0x48] sm:$0xff]
        %v551 = vld [vmem:[%s375 + $0x50] sm:$0xff]
        %v552 = vld [vmem:[%s375 + $0x58] sm:$0xff]
        %v553 = vld [vmem:[%s375 + $0x60] sm:$0xff]
        %v554 = vld [vmem:[%s375 + $0x68] sm:$0xff]
        %v555 = vld [vmem:[%s375 + $0x70] sm:$0xff]
        %v556 = vld [vmem:[%s375 + $0x78] sm:$0xff]
        %v557 = vld [vmem:[%s375 + $0x80] sm:$0xff]
        %v558 = vld [vmem:[%s375 + $0x88] sm:$0xff]
        %v559 = vld [vmem:[%s375 + $0x90] sm:$0xff]
        %v560 = vld [vmem:[%s375 + $0x98] sm:$0xff]
        %v561 = vld [vmem:[%s375 + $0xa0] sm:$0xff]
        %v562 = vld [vmem:[%s375 + $0xa8] sm:$0xff]
        %v563 = vld [vmem:[%s375 + $0xb0] sm:$0xff]
        %v564 = vld [vmem:[%s375 + $0xb8] sm:$0xff]
        %v565 = vld [vmem:[%s375 + $0xc0] sm:$0xff]
        %v566 = vld [vmem:[%s375 + $0xc8] sm:$0xff]
        %v567 = vld [vmem:[%s375 + $0xd0] sm:$0xff]
        %v568 = vld [vmem:[%s375 + $0xd8] sm:$0xff]
        %v569 = vld [vmem:[%s375 + $0xe0] sm:$0xff]
        %v570 = vld [vmem:[%s375 + $0xe8] sm:$0xff]
        %v571 = vld [vmem:[%s375 + $0xf0] sm:$0xff]
        %v572 = vld [vmem:[%s375 + $0xf8] sm:$0xff]
        %v573 = vld [vmem:[%s476] sm:$0x1]
        %v575 = vlaneseq
        %v576 = vshrl.u32 %v575, 7
        %v577 = vsub.s32 0, %v576
        %v578 = vrot.slane %v573, %v577
        %580 = vmatprep.subr.mxu0 0.0
        %581 = vmatpush1.msra.mxu0 %v556
        %582 = vmatprep.subr.mxu0 0.0
        %583 = vmatpush1.msra.mxu0 %v555
        %584 = vmatprep.subr.mxu0 0.0
        %585 = vmatpush1.msra.mxu0 %v554
        %586 = vmatprep.subr.mxu0 0.0
        %587 = vmatpush1.msra.mxu0 %v553
        %588 = vmatprep.subr.mxu0 0.0
        %589 = vmatpush1.msra.mxu0 %v552
        %590 = vmatprep.subr.mxu0 0.0
        %591 = vmatpush1.msra.mxu0 %v551
        %592 = vmatprep.subr.mxu0 0.0
        %593 = vmatpush1.msra.mxu0 %v550
        %594 = vmatprep.subr.mxu0 0.0
        %595 = vmatpush1.msra.mxu0 %v549
        %596 = vmatprep.subr.mxu0 0.0
        %597 = vmatpush1.msra.mxu0 %v548
        %598 = vmatprep.subr.mxu0 0.0
        %599 = vmatpush1.msra.mxu0 %v547
        %600 = vmatprep.subr.mxu0 0.0
        %601 = vmatpush1.msra.mxu0 %v546
        %602 = vmatprep.subr.mxu0 0.0
        %603 = vmatpush1.msra.mxu0 %v545
        %604 = vmatprep.subr.mxu0 0.0
        %605 = vmatpush1.msra.mxu0 %v544
        %606 = vmatprep.subr.mxu0 0.0
        %607 = vmatpush1.msra.mxu0 %v543
        %608 = vmatprep.subr.mxu0 0.0
        %609 = vmatpush1.msra.mxu0 %v542
        %610 = vmatprep.subr.mxu0 0.0
        %611 = vmatpush1.msra.mxu0 %v541
        %612 = vmatprep.subr.mxu0 0.0
        %613 = vmatpush2.msra.mxu0 %v572
        %614 = vmatprep.subr.mxu0 0.0
        %615 = vmatpush2.msra.mxu0 %v571
        %616 = vmatprep.subr.mxu0 0.0
        %617 = vmatpush2.msra.mxu0 %v570
        %618 = vmatprep.subr.mxu0 0.0
        %619 = vmatpush2.msra.mxu0 %v569
        %620 = vmatprep.subr.mxu0 0.0
        %621 = vmatpush2.msra.mxu0 %v568
        %622 = vmatprep.subr.mxu0 0.0
        %623 = vmatpush2.msra.mxu0 %v567
        %624 = vmatprep.subr.mxu0 0.0
        %625 = vmatpush2.msra.mxu0 %v566
        %626 = vmatprep.subr.mxu0 0.0
        %627 = vmatpush2.msra.mxu0 %v565
        %628 = vmatprep.subr.mxu0 0.0
        %629 = vmatpush2.msra.mxu0 %v564
        %630 = vmatprep.subr.mxu0 0.0
        %631 = vmatpush2.msra.mxu0 %v563
        %632 = vmatprep.subr.mxu0 0.0
        %633 = vmatpush2.msra.mxu0 %v562
        %634 = vmatprep.subr.mxu0 0.0
        %635 = vmatpush2.msra.mxu0 %v561
        %636 = vmatprep.subr.mxu0 0.0
        %637 = vmatpush2.msra.mxu0 %v560
        %638 = vmatprep.subr.mxu0 0.0
        %639 = vmatpush2.msra.mxu0 %v559
        %640 = vmatprep.subr.mxu0 0.0
        %641 = vmatpush2.msra.mxu0 %v558
        %642 = vmatprep.subr.mxu0 0.0
        %643 = vmatpush2.msra.mxu0 %v557
        %644 = vmatprep.mubr.f32.mxu0 %v540
        %645 = vmatmul.mubr.f32.gmra.mxu0 %v539
        %v646 = vpop.f32.mrf.mxu0
        %v647 = vadd.f32 %v578, %v646
        %v648 = vpop.f32.mrf.mxu0
        %649 = vdwg.mxu0
        %650 = vst [vmem:[%s439] sm:$0xff] %v647
        %s651 = sand.u32 %s233, 1
        %s652 = scalar_lea.sflag [#allocation5], %s651
        %s653 = sand.u32 %s233, 1
        %s654 = smul.addr %s653, 8
        %s655 = scalar_lea.vmem [#allocation8], %s654
        // Predicated region
        $region57: #{tpu_custom_call.1} parent=43 // pred_check
          %p656 = pneg %p243
        $region58: #{tpu_custom_call.1} parent=43 // pred_check_branch
          %658 = sbr.rel (%p656) target = $region60
        $region59: #{tpu_custom_call.1} parent=43 // pred_region
          %s660 = ssub.s32 128, 128
          %661 = vsyncadd %s652, %s660
          %s662 = smul.addr %s32, 2
          %s663 = sadd.s32 %s33, %s662
          %s664 = smul.addr %s31, 4
          %s665 = sadd.s32 %s663, %s664
          %s666 = smul.addr %s665, 128
          %s667 = scalar_lea.hbm %s6, %s666
          %s669 = sshll.u32 %s655, 4
          %s670 = int_to_ptr.vmem [resolvable:$true] %s669
          %672 = dma.vmem_to_hbm [thread:$0]  %s670, 128, %s667, %s652
        $region60: #{tpu_custom_call.1} parent=43 // pred_fallthru
          _
      $region44: #{tpu_custom_call.1} parent=5 // pred_fallthru
        _
      %p673 = scmp.le.s32.totalorder 2, %s21
      // Predicated region
      $region61: #{tpu_custom_call.1} parent=5 // pred_check
        %p674 = pneg %p673
      $region62: #{tpu_custom_call.1} parent=5 // pred_check_branch
        %676 = sbr.rel (%p674) target = $region64
      $region63: #{tpu_custom_call.1} parent=5 // pred_region
        %s677 = ssub.s32 %s21, 2
        // Predicated region
        $region65: #{tpu_custom_call.1} parent=63 // pred_check
          %p678 = pneg %p249
        $region66: #{tpu_custom_call.1} parent=63 // pred_check_branch
          %680 = sbr.rel (%p678) target = $region68
        $region67: #{tpu_custom_call.1} parent=63 // pred_region
          %s681 = sand.u32 %s234, 1
          %s682 = scalar_lea.sflag [#allocation5], %s681
          %s683 = sand.u32 %s234, 1
          %s684 = smul.addr %s683, 8
          %s685 = scalar_lea.vmem [#allocation8], %s684
          %686 = dma.done %s682, 128
        $region68: #{tpu_custom_call.1} parent=63 // pred_fallthru
          _
      $region64: #{tpu_custom_call.1} parent=5 // pred_fallthru
        _
    $region6: #{tpu_custom_call.1} parent=1 // loop_footer
      %s25 = sadd.s32 1, %s21
    $region7: #{tpu_custom_call.1} parent=1 // loop_footer_branch
      %20 = sbr.rel target = $region3
    $region8: #{tpu_custom_call.1} parent=1 // loop_exit
      _
    %687 = vsyncpa [#allocation4], 1
    %s688 = scalar_lea.sflag [#allocation4], 1
    %689 = vsyncpa %s688, 1
    %690 = vsyncpa [#allocation7], 1
    %s691 = scalar_lea.sflag [#allocation7], 1
    %692 = vsyncpa %s691, 1
    %693 = vsyncpa [#allocation5], 1
    %s694 = scalar_lea.sflag [#allocation5], 1
    %695 = vsyncpa %s694, 1

</llo_original>
